<compile_context>
chip_gen: v7x
topology: tpu7x:2x2x1
jax: 0.10.0
libtpu: 0.0.40
codegen_flags: <defaults>
</compile_context>

<pallas_src>
import jax
import jax.numpy as jnp
from jax.experimental import pallas as pl
from jax.experimental.pallas import tpu as pltpu


_LANE = 128
_SUBLANE = 8
_NEG_LARGE = -1e30  # mask value for padded class columns (f32 only!)

_TB_CANDIDATES = (1024, 512, 384, 256, 128, 64, 32, 16, 8)


def _round_up(x, m):
    return ((x + m - 1) // m) * m


def _cdiv(a, b):
    return (a + b - 1) // b


def _vmem_capacity_bytes():
    try:
        return int(pltpu.get_tpu_info().vmem_capacity_bytes)
    except Exception:
        # Fallback: assume the smallest per-core VMEM (v7x, 64 MiB/TC).
        return 64 * 1024 * 1024


def _tile_bytes(tb, dim_in, c_pad, x_itemsize, out_itemsize):
    return (2 * tb * dim_in * x_itemsize      # double-buffered x tile
            + 2 * tb * c_pad * out_itemsize   # double-buffered out tile
            + 3 * tb * c_pad * 4)             # f32 logits / exp softmax slabs


def _choose_batch_tile(b8, dim_in, c_pad, x_itemsize, out_itemsize, budget):
    """Largest candidate TB that fits the tile budget, >=2 grid steps when possible."""
    tb = _SUBLANE
    for cand in _TB_CANDIDATES:
        if _tile_bytes(cand, dim_in, c_pad, x_itemsize, out_itemsize) <= budget:
            tb = cand
            break
    tb = min(tb, b8)  # never larger than the (sublane-padded) batch
    # Megacore (v7x): keep >= 2 grid steps when each half still fills MXU M (128).
    if b8 >= 2 * _LANE and _cdiv(b8, tb) < 2:
        tb = max(_LANE, _round_up(_cdiv(b8, 2), _SUBLANE))
    return tb


def _head_kernel(x_ref, w_ref, b_ref, o_ref):
    # x_ref: [TB, dim_in]     batch tile
    # w_ref: [dim_in, C_pad]  MXU-native [K, N] layout, VMEM-resident
    # b_ref: [1, C_pad] f32   (padded columns hold -1e30)
    # o_ref: [TB, C_pad]
    logits = jnp.dot(x_ref[...], w_ref[...],
                     preferred_element_type=jnp.float32) + b_ref[...]
    # Numerically-stable softmax over the class (lane) axis, all in f32.
    m = jnp.max(logits, axis=-1, keepdims=True)
    e = jnp.exp(logits - m)
    o_ref[...] = (e / jnp.sum(e, axis=-1, keepdims=True)).astype(o_ref.dtype)


def prepare_head_params(weight, bias, compute_dtype=None):
    """One-off (init-time) parameter preparation.

    Args:
      weight: [num_classes, dim_in]  (PyTorch nn.Linear layout)
      bias:   [num_classes]
      compute_dtype: optional (e.g. jnp.bfloat16) to run the MXU at bf16 rate
        on v6e/v7x while keeping f32 accumulation and f32 softmax.
    Returns:
      (w_t [dim_in, c_pad], bias2d [1, c_pad] f32, num_classes)
    """
    C, dim_in = weight.shape
    c_pad = _round_up(C, _LANE)
    if compute_dtype is not None:
        weight = weight.astype(compute_dtype)
    # Transpose to [K, N] and zero-pad the class axis (pad columns must be 0
    # so the -1e30 bias mask below is exact).
    w_t = jnp.pad(jnp.transpose(weight), ((0, 0), (0, c_pad - C)))
    b2d = jnp.pad(bias.astype(jnp.float32), ((0, c_pad - C),),
                  constant_values=_NEG_LARGE).reshape(1, c_pad)
    return w_t, b2d, C


def transformer_basic_head_forward(x, w_t, b2d, num_classes):
    """
    Eval-mode forward of TransformerBasicHead (act_func='softmax', dropout=0.0)
    using init-time-prepared parameters.

    Args:
      x:   [B, dim_in]
      w_t: [dim_in, c_pad]  from prepare_head_params
      b2d: [1, c_pad] f32   from prepare_head_params
      num_classes: original (unpadded) class count
    Returns:
      [B, num_classes] softmax probabilities (same dtype as x).
    """
    B, dim_in = x.shape
    assert w_t.shape[0] == dim_in
    c_pad = w_t.shape[1]

    out_dtype = x.dtype
    if x.dtype != w_t.dtype:
        x = x.astype(w_t.dtype)  # e.g. bf16 compute path
    x_itemsize = jnp.dtype(x.dtype).itemsize
    w_itemsize = jnp.dtype(w_t.dtype).itemsize
    out_itemsize = jnp.dtype(out_dtype).itemsize

    # --- Generation-aware VMEM budget. ---
    capacity = _vmem_capacity_bytes()
    cap = min(int(capacity * 0.9), 100 * 1024 * 1024)          # ~57 MiB v7x, 100 MiB v5e/v6e
    resident = 2 * (dim_in * c_pad * w_itemsize + c_pad * 4)   # both pipeline buffers
    tile_budget = cap - (8 << 20) - resident

    # --- Batch tiling: pad only to a sublane multiple, partial last block. ---
    b8 = _round_up(B, _SUBLANE)
    TB = _choose_batch_tile(b8, dim_in, c_pad, x_itemsize, out_itemsize, tile_budget)
    if b8 != B:
        x = jnp.pad(x, ((0, b8 - B), (0, 0)))  # <= 7 rows
    grid = (_cdiv(b8, TB),)                    # last step may be partial (masked write)

    needed = resident + _tile_bytes(TB, dim_in, c_pad, x_itemsize, out_itemsize)
    vmem_limit = int(min(cap, max(32 << 20, needed + (8 << 20))))

    out = pl.pallas_call(
        _head_kernel,
        out_shape=jax.ShapeDtypeStruct((b8, c_pad), out_dtype),
        grid_spec=pltpu.PrefetchScalarGridSpec(
            num_scalar_prefetch=0,
            grid=grid,
            in_specs=[
                pl.BlockSpec((TB, dim_in), lambda i: (i, 0)),      # x tile (pipelined)
                pl.BlockSpec((dim_in, c_pad), lambda i: (0, 0)),   # weight (VMEM-resident)
                pl.BlockSpec((1, c_pad), lambda i: (0, 0)),        # bias   (VMEM-resident)
            ],
            out_specs=pl.BlockSpec((TB, c_pad), lambda i: (i, 0)),
        ),
        compiler_params=pltpu.CompilerParams(
            dimension_semantics=("parallel",),
            vmem_limit_bytes=vmem_limit),
    )(x, w_t, b2d)

    return out[:B, :num_classes]


def transformer_basic_head(x, weight, bias):
    """Convenience one-shot wrapper (prepares params per call).

    Real deployments should call prepare_head_params() once at init and reuse
    the prepared (transposed + lane-padded) parameters across forward calls.
    """
    w_t, b2d, C = prepare_head_params(weight, bias)
    return transformer_basic_head_forward(x, w_t, b2d, C)


if __name__ == "__main__":
    # Small shapes consistent with the module: B tokens, dim_in features.
    B, dim_in, num_classes = 8, 32, 16

    key = jax.random.PRNGKey(0)
    kx, kw, kb = jax.random.split(key, 3)

    x = jax.random.normal(kx, (B, dim_in), dtype=jnp.float32)
    # Deterministic init of nn.Linear(dim_in, num_classes) parameters.
    bound = 1.0 / (dim_in ** 0.5)
    weight = jax.random.uniform(kw, (num_classes, dim_in),
                                minval=-bound, maxval=bound, dtype=jnp.float32)
    bias = jax.random.uniform(kb, (num_classes,),
                              minval=-bound, maxval=bound, dtype=jnp.float32)

    # Init-time (one-off) parameter prep: lane-pad class axis + transpose to [K, N].
    w_t, b2d, C = prepare_head_params(weight, bias)

    out = transformer_basic_head_forward(x, w_t, b2d, C)
    out = jax.block_until_ready(out)

    # Reference check against plain JAX (Linear + softmax over dim=1).
    ref = jax.nn.softmax(x @ weight.T + bias, axis=1)
    assert out.shape == (B, num_classes)
    assert jnp.allclose(out, ref, atol=2e-5, rtol=1e-4), \
        float(jnp.max(jnp.abs(out - ref)))

    print("KERNEL_OK")
</pallas_src>

<mosaic_0001>
module attributes {stable_mosaic.version = 11 : i64} {
  func.func @_head_kernel(%arg0: i32, %arg1: memref<8x32xf32, #tpu.memory_space<vmem>>, %arg2: memref<32x128xf32, #tpu.memory_space<vmem>>, %arg3: memref<1x128xf32, #tpu.memory_space<vmem>>, %arg4: memref<8x128xf32, #tpu.memory_space<vmem>>) attributes {dimension_semantics = [#tpu.dimension_semantics<parallel>], iteration_bounds = array<i64: 1>, scalar_prefetch = 0 : i64, scratch_operands = 0 : i64, tpu.core_type = #tpu.core_type<tc>, window_params = [{transform_indices = @transform_0, window_bounds = array<i64: 8, 32>}, {pipeline_mode = #tpu.pipeline_mode<synchronous>, transform_indices = @transform_1, window_bounds = array<i64: 32, 128>}, {pipeline_mode = #tpu.pipeline_mode<synchronous>, transform_indices = @transform_2, window_bounds = array<i64: 1, 128>}, {transform_indices = @transform_3, window_bounds = array<i64: 8, 128>}]} {
    %c0 = arith.constant 0 : index
    %c0_0 = arith.constant 0 : index
    %0 = vector.load %arg1[%c0, %c0_0] : memref<8x32xf32, #tpu.memory_space<vmem>>, vector<8x32xf32>
    %c0_1 = arith.constant 0 : index
    %c0_2 = arith.constant 0 : index
    %1 = vector.load %arg2[%c0_1, %c0_2] : memref<32x128xf32, #tpu.memory_space<vmem>>, vector<32x128xf32>
    %cst = arith.constant dense<0.000000e+00> : vector<8x128xf32>
    %2 = tpu.matmul %0, %1, %cst {dimension_numbers = #tpu.dot_dimension_numbers<[1], [0], [0], [1], [0, 0, 1, 1], [], []>} : vector<8x32xf32>, vector<32x128xf32>, vector<8x128xf32> -> vector<8x128xf32>
    %c0_3 = arith.constant 0 : index
    %c0_4 = arith.constant 0 : index
    %3 = vector.load %arg3[%c0_3, %c0_4] : memref<1x128xf32, #tpu.memory_space<vmem>>, vector<1x128xf32>
    %4 = vector.broadcast %3 : vector<1x128xf32> to vector<8x128xf32>
    %5 = arith.addf %2, %4 : vector<8x128xf32>
    %cst_5 = arith.constant dense<0xFF800000> : vector<8xf32>
    %6 = vector.multi_reduction <maximumf>, %5, %cst_5 [1] : vector<8x128xf32> to vector<8xf32>
    %7 = vector.shape_cast %6 : vector<8xf32> to vector<8x1xf32>
    %8 = vector.broadcast %7 : vector<8x1xf32> to vector<8x128xf32>
    %9 = arith.subf %5, %8 : vector<8x128xf32>
    %10 = math.exp %9 : vector<8x128xf32>
    %cst_6 = arith.constant dense<0.000000e+00> : vector<8xf32>
    %11 = vector.multi_reduction <add>, %10, %cst_6 [1] : vector<8x128xf32> to vector<8xf32>
    %12 = vector.shape_cast %11 : vector<8xf32> to vector<8x1xf32>
    %13 = vector.broadcast %12 : vector<8x1xf32> to vector<8x128xf32>
    %14 = arith.divf %10, %13 : vector<8x128xf32>
    %c0_7 = arith.constant 0 : index
    %c0_8 = arith.constant 0 : index
    %15 = vector.load %arg4[%c0_7, %c0_8] : memref<8x128xf32, #tpu.memory_space<vmem>>, vector<8x128xf32>
    tpu.vector_store %arg4[%c0_7, %c0_8], %14 {strides = array<i32>} : memref<8x128xf32, #tpu.memory_space<vmem>>, vector<8x128xf32>,
    return
  }
  func.func @transform_0(%arg0: i32) -> (i32, i32) {
    %c0_i32 = arith.constant 0 : i32
    %c0_i32_0 = arith.constant 0 : i32
    return %arg0, %c0_i32 : i32, i32
  }
  func.func @transform_1(%arg0: i32) -> (i32, i32) {
    %c0_i32 = arith.constant 0 : i32
    %c0_i32_0 = arith.constant 0 : i32
    %c0_i32_1 = arith.constant 0 : i32
    return %c0_i32, %c0_i32_0 : i32, i32
  }
  func.func @transform_2(%arg0: i32) -> (i32, i32) {
    %c0_i32 = arith.constant 0 : i32
    %c0_i32_0 = arith.constant 0 : i32
    %c0_i32_1 = arith.constant 0 : i32
    return %c0_i32, %c0_i32_0 : i32, i32
  }
  func.func @transform_3(%arg0: i32) -> (i32, i32) {
    %c0_i32 = arith.constant 0 : i32
    %c0_i32_0 = arith.constant 0 : i32
    return %arg0, %c0_i32 : i32, i32
  }
}

</mosaic_0001>

<llo_original>
// kernel: tpu_custom_call.1
$region0: #{tpu_custom_call.1}
  #allocation0 [shape = 'u32[]', space=smem, size = 0x4, offset = 0x4, fixed_abs, tag = 'smem constant byte address 0x4 - core index']
  #allocation1 [shape = 'u32[144,128]{1,0:T(1,128)}', space=vmem, size = 0x12000, scoped, tag = 'internal scratch']
  %s0 = inlined_call_operand.hbm [shape: f32[8,32], index: 0, kind: input, shape index: {}]
  %s1 = inlined_call_operand.hbm [shape: f32[32,128], index: 1, kind: input, shape index: {}]
  %s2 = inlined_call_operand.vmem [shape: f32[1,128], index: 2, kind: input, shape index: {}]
  %s3 = inlined_call_operand.hbm [shape: f32[8,128], index: 3, kind: output, shape index: {}]
  %s4 = sld [smem:[#allocation0]]
  $region30: #{tpu_custom_call.1} parent=0
    _
  %s6 = ssub.s32 1, %s4
  %s7 = scalar_select 0, %s6, %s4
  $region1: #{tpu_custom_call.1} parent=0
    #allocation2 [shape = 'u8[4096]{0}', space=vmem, size = 0x1000, scoped, tag = 'input window, operand 0, single buffered']
    #allocation3 [shape = 's32[1]{0}', space=sflag, size = 0x4, scoped, tag = 'scoped memory for tpu_custom_call.1']
    #allocation4 [shape = 's32[1]{0}', space=sflag, size = 0x4, scoped, tag = 'scoped memory for tpu_custom_call.1']
    #allocation5 [shape = 'u8[16384]{0}', space=vmem, size = 0x4000, scoped, tag = 'input window, operand 1, single buffered']
    #allocation6 [shape = 's32[1]{0}', space=sflag, size = 0x4, scoped, tag = 'scoped memory for tpu_custom_call.1']
    #allocation7 [shape = 'u8[4096]{0}', space=vmem, size = 0x1000, scoped, tag = 'output window, operand 0, single buffered']
    %8 = vsyncpa [#allocation3], 0
    %9 = vsyncpa [#allocation6], 0
    %10 = vsyncpa [#allocation4], 0
    // Predicated region
    $region2: #{tpu_custom_call.1} parent=1 // pred_check
      _
    $region3: #{tpu_custom_call.1} parent=1 // pred_check_branch
      %12 = sbr.rel (0) target = $region5
    $region4: #{tpu_custom_call.1} parent=1 // pred_region
      %s14 = ssub.s32 128, 128
      %15 = vsyncadd [#allocation3], %s14
      %s17 = sshll.u32 [#allocation2], 4
      %s18 = int_to_ptr.vmem [resolvable:$true] %s17
      %20 = dma.hbm_to_vmem [thread:$0]  %s0, 128, %s18, [#allocation3]
    $region5: #{tpu_custom_call.1} parent=1 // pred_fallthru
      _
    // Predicated region
    $region6: #{tpu_custom_call.1} parent=1 // pred_check
      _
    $region7: #{tpu_custom_call.1} parent=1 // pred_check_branch
      %22 = sbr.rel (0) target = $region9
    $region8: #{tpu_custom_call.1} parent=1 // pred_region
      %s24 = ssub.s32 512, 512
      %25 = vsyncadd [#allocation6], %s24
      %s26 = sshll.u32 [#allocation5], 4
      %s27 = int_to_ptr.vmem [resolvable:$true] %s26
      %32 = dma.hbm_to_vmem [thread:$0]  %s1, 512, %s27, [#allocation6], 128, 128, 8
    $region9: #{tpu_custom_call.1} parent=1 // pred_fallthru
      _
    // Predicated region
    $region10: #{tpu_custom_call.1} parent=1 // pred_check
      _
    $region11: #{tpu_custom_call.1} parent=1 // pred_check_branch
      %34 = sbr.rel (0) target = $region13
    $region12: #{tpu_custom_call.1} parent=1 // pred_region
      _
    $region13: #{tpu_custom_call.1} parent=1 // pred_fallthru
      _
    // Predicated region
    $region14: #{tpu_custom_call.1} parent=1 // pred_check
      _
    $region15: #{tpu_custom_call.1} parent=1 // pred_check_branch
      %36 = sbr.rel (0) target = $region17
    $region16: #{tpu_custom_call.1} parent=1 // pred_region
      %37 = dma.done [#allocation3], 128
    $region17: #{tpu_custom_call.1} parent=1 // pred_fallthru
      _
    // Predicated region
    $region18: #{tpu_custom_call.1} parent=1 // pred_check
      _
    $region19: #{tpu_custom_call.1} parent=1 // pred_check_branch
      %39 = sbr.rel (0) target = $region21
    $region20: #{tpu_custom_call.1} parent=1 // pred_region
      %40 = dma.done [#allocation6], 512
    $region21: #{tpu_custom_call.1} parent=1 // pred_fallthru
      _
    %v41 = vld [vmem:[#allocation2] sm:$0xff]
    %v42 = vld [vmem:[#allocation5] sm:$0xff]
    %v43 = vld [vmem:[#allocation5 + $0x8] sm:$0xff]
    %v44 = vld [vmem:[#allocation5 + $0x10] sm:$0xff]
    %v45 = vld [vmem:[#allocation5 + $0x18] sm:$0xff]
    %v46 = vld [vmem:[%s2] sm:$0x1]
    %v48 = vlaneseq
    %v49 = vshrl.u32 %v48, 7
    %v50 = vsub.s32 0, %v49
    %v51 = vrot.slane %v46, %v50
    %vm53 = vcmask 261120
    %v55 = vsel %vm53, %v41, 0
    %57 = vmatprep.subr.mxu0 0.0
    %58 = vmatpush1.msra.mxu0 %v42
    %59 = vmatprep.subr.mxu0 0.0
    %60 = vmatpush1.msra.mxu0 %v43
    %61 = vmatprep.subr.mxu0 0.0
    %62 = vmatpush1.msra.mxu0 %v44
    %63 = vmatprep.subr.mxu0 0.0
    %64 = vmatpush1.msra.mxu0 %v45
    %65 = vmatprep.subr.mxu0 0.0
    %66 = vmatpush1.msra.mxu0 0.0
    %67 = vmatprep.subr.mxu0 0.0
    %68 = vmatpush1.msra.mxu0 0.0
    %69 = vmatprep.subr.mxu0 0.0
    %70 = vmatpush1.msra.mxu0 0.0
    %71 = vmatprep.subr.mxu0 0.0
    %72 = vmatpush1.msra.mxu0 0.0
    %73 = vmatprep.subr.mxu0 0.0
    %74 = vmatpush1.msra.mxu0 0.0
    %75 = vmatprep.subr.mxu0 0.0
    %76 = vmatpush1.msra.mxu0 0.0
    %77 = vmatprep.subr.mxu0 0.0
    %78 = vmatpush1.msra.mxu0 0.0
    %79 = vmatprep.subr.mxu0 0.0
    %80 = vmatpush1.msra.mxu0 0.0
    %81 = vmatprep.subr.mxu0 0.0
    %82 = vmatpush1.msra.mxu0 0.0
    %83 = vmatprep.subr.mxu0 0.0
    %84 = vmatpush1.msra.mxu0 0.0
    %85 = vmatprep.subr.mxu0 0.0
    %86 = vmatpush1.msra.mxu0 0.0
    %87 = vmatprep.subr.mxu0 0.0
    %88 = vmatpush1.msra.mxu0 0.0
    %89 = vmatprep.subr.mxu0 0.0
    %90 = vmatpush1.msra.mxu0 0.0
    %91 = vmatprep.subr.mxu0 0.0
    %92 = vmatpush1.msra.mxu0 0.0
    %93 = vmatprep.subr.mxu0 0.0
    %94 = vmatpush1.msra.mxu0 0.0
    %95 = vmatprep.subr.mxu0 0.0
    %96 = vmatpush1.msra.mxu0 0.0
    %97 = vmatprep.subr.mxu0 0.0
    %98 = vmatpush1.msra.mxu0 0.0
    %99 = vmatprep.subr.mxu0 0.0
    %100 = vmatpush1.msra.mxu0 0.0
    %101 = vmatprep.subr.mxu0 0.0
    %102 = vmatpush1.msra.mxu0 0.0
    %103 = vmatprep.subr.mxu0 0.0
    %104 = vmatpush1.msra.mxu0 0.0
    %105 = vmatprep.subr.mxu0 0.0
    %106 = vmatpush1.msra.mxu0 0.0
    %107 = vmatprep.subr.mxu0 0.0
    %108 = vmatpush1.msra.mxu0 0.0
    %109 = vmatprep.subr.mxu0 0.0
    %110 = vmatpush1.msra.mxu0 0.0
    %111 = vmatprep.subr.mxu0 0.0
    %112 = vmatpush1.msra.mxu0 0.0
    %113 = vmatprep.subr.mxu0 0.0
    %114 = vmatpush1.msra.mxu0 0.0
    %115 = vmatprep.subr.mxu0 0.0
    %116 = vmatpush1.msra.mxu0 0.0
    %117 = vmatprep.subr.mxu0 0.0
    %118 = vmatpush1.msra.mxu0 0.0
    %119 = vmatprep.subr.mxu0 0.0
    %120 = vmatpush1.msra.mxu0 0.0
    %121 = vmatprep.mubr.f32.mxu0 0.0
    %122 = vmatmul.mubr.f32.gmra.mrb[0].mxu0 %v55
    %v123 = vpop.f32.mrb[0].mxu0
    %v124 = vadd.f32 %v51, %v123
    %v125 = vpop.f32.mrb[0].mxu0
    %126 = vdwg.mxu0
    %127 = vmax.xlane.f32.xlu0 %v124
    %v128 = vpop.xlane.xlu0 %127
    %v129 = vsub.f32 %v124, %v128
    %v130 = vmul.f32 %v129, 1.442695
    %v131 = vpow.pop %v130
    %132 = vadd.xlane.f32.xlu0 %v131
    %v133 = vpop.xlane.xlu0 %132
    %v134 = vrcp.pop %v133
    %v135 = vmul.f32 %v131, %v134
    %136 = vst [vmem:[#allocation7] sm:$0xff] %v135
    // Predicated region
    $region22: #{tpu_custom_call.1} parent=1 // pred_check
      _
    $region23: #{tpu_custom_call.1} parent=1 // pred_check_branch
      %138 = sbr.rel (0) target = $region25
    $region24: #{tpu_custom_call.1} parent=1 // pred_region
      %s140 = ssub.s32 128, 128
      %141 = vsyncadd [#allocation4], %s140
      %s143 = sshll.u32 [#allocation7], 4
      %s144 = int_to_ptr.vmem [resolvable:$true] %s143
      %146 = dma.vmem_to_hbm [thread:$0]  %s144, 128, %s3, [#allocation4]
    $region25: #{tpu_custom_call.1} parent=1 // pred_fallthru
      _
    // Predicated region
    $region26: #{tpu_custom_call.1} parent=1 // pred_check
      _
    $region27: #{tpu_custom_call.1} parent=1 // pred_check_branch
      %148 = sbr.rel (0) target = $region29
    $region28: #{tpu_custom_call.1} parent=1 // pred_region
      %149 = dma.done [#allocation4], 128
    $region29: #{tpu_custom_call.1} parent=1 // pred_fallthru
      _
    %150 = vsyncpa [#allocation3], 1
    %151 = vsyncpa [#allocation6], 1
    %152 = vsyncpa [#allocation4], 1

</llo_original>
